<compile_context>
chip_gen: v7x
topology: tpu7x:2x2x1
jax: 0.10.0
libtpu: 0.0.40
codegen_flags: <defaults>
</compile_context>

<pallas_src>
import jax
import jax.numpy as jnp
from jax import lax
from jax.experimental import pallas as pl
from jax.experimental.pallas import tpu as pltpu


# ----------------------------------------------------------------------------
# Fused Pallas kernel: encoders -> projections -> normalize -> logits
# ----------------------------------------------------------------------------
def _clip_fused_kernel(text_ref, image_ref,
                       wt_enc_ref, bt_enc_ref,
                       wi_enc_ref, bi_enc_ref,
                       wt_proj_ref, wi_proj_ref,
                       scale_ref, logits_ref):
    # Synthetic encoders (Linear + ReLU).  Weights are pre-transposed to
    # (Din, Dout) in the wrapper, so these are plain (M,K)x(K,N) MXU dots.
    et = jnp.dot(text_ref[...], wt_enc_ref[...],
                 preferred_element_type=jnp.float32) + bt_enc_ref[...]
    et = jnp.maximum(et, 0.0)
    ei = jnp.dot(image_ref[...], wi_enc_ref[...],
                 preferred_element_type=jnp.float32) + bi_enc_ref[...]
    ei = jnp.maximum(ei, 0.0)

    # CLIP projections (nn.Linear, bias=False), weights pre-transposed.
    pt = jnp.dot(et, wt_proj_ref[...], preferred_element_type=jnp.float32)
    pi = jnp.dot(ei, wi_proj_ref[...], preferred_element_type=jnp.float32)

    # F.normalize(p=2, dim=1): x / max(||x||_2, 1e-12).
    #   1 / max(sqrt(s), 1e-12) == rsqrt(max(s, 1e-24))  (rsqrt -> EUP slot).
    # The (precomputed, clamped) temperature scale is folded into the (B, E)
    # text-side normalize so no extra multiply touches the (B, B) logits.
    inv_t = scale_ref[0] * lax.rsqrt(
        jnp.maximum(jnp.sum(pt * pt, axis=1, keepdims=True), 1e-24))
    inv_i = lax.rsqrt(
        jnp.maximum(jnp.sum(pi * pi, axis=1, keepdims=True), 1e-24))
    pt = pt * inv_t
    pi = pi * inv_i

    # logits = embd_text @ embd_image.T as an NT matmul (contract last dims)
    # — no explicit transpose, single lane-dense output.  logits.T is taken
    # in the JAX wrapper.  (Checked: at these sizes the NT dot lowers without
    # a materialized vxpose of pi; re-verify with pl.lower_as_mlir at real B.)
    logits_ref[...] = lax.dot_general(
        pt, pi, (((1,), (1,)), ((), ())), preferred_element_type=jnp.float32)


# ----------------------------------------------------------------------------
# Wrappers
# ----------------------------------------------------------------------------
def prepare_params(params):
    """Transpose weights once to (Din, Dout); precompute the clamped scale."""
    f32 = jnp.float32
    # Parameter-only (not data-dependent): clamp(exp(temperature), .01, 100).
    scale = jnp.clip(jnp.exp(params["temperature"].astype(f32)), 0.01, 100.0)
    return {
        "wt_enc": params["txt_enc_w"].T.astype(f32),
        "bt_enc": params["txt_enc_b"].reshape(1, -1).astype(f32),
        "wi_enc": params["img_enc_w"].T.astype(f32),
        "bi_enc": params["img_enc_b"].reshape(1, -1).astype(f32),
        "wt_proj": params["txt_proj_w"].T.astype(f32),
        "wi_proj": params["img_proj_w"].T.astype(f32),
        "scale": scale.reshape((1,)),
        # TODO(synk): at real CLIP sizes store these in bf16 (halves weight
        # DMA) and cast at the dot operands; keep elementwise work in f32.
    }


@jax.jit
def clip_forward(prepared, text, image):
    """Full CLIP.forward: encoders -> projections -> normalize -> logits."""
    B = text.shape[0]
    # Row-major flatten is a bitcast in XLA (no extra kernel / copy).
    image_flat = image.reshape(B, -1).astype(jnp.float32)
    text = text.astype(jnp.float32)   # no-op at f32 inputs

    dt_in, dt_out = prepared["wt_enc"].shape
    di_in, di_out = prepared["wi_enc"].shape
    e = prepared["wt_proj"].shape[1]

    flops = 2 * B * (dt_in * dt_out + di_in * di_out
                     + dt_out * e + di_out * e + B * e)
    bytes_accessed = 4 * (text.size + image_flat.size
                          + sum(prepared[k].size for k in
                                ("wt_enc", "bt_enc", "wi_enc", "bi_enc",
                                 "wt_proj", "wi_proj"))
                          + B * B + 1)

    vmem = pltpu.MemorySpace.VMEM
    logits = pl.pallas_call(
        _clip_fused_kernel,
        out_shape=jax.ShapeDtypeStruct((B, B), jnp.float32),
        in_specs=[
            pl.BlockSpec(memory_space=vmem),                    # text
            pl.BlockSpec(memory_space=vmem),                    # image (flat)
            pl.BlockSpec(memory_space=vmem),                    # wt_enc
            pl.BlockSpec(memory_space=vmem),                    # bt_enc
            pl.BlockSpec(memory_space=vmem),                    # wi_enc
            pl.BlockSpec(memory_space=vmem),                    # bi_enc
            pl.BlockSpec(memory_space=vmem),                    # wt_proj
            pl.BlockSpec(memory_space=vmem),                    # wi_proj
            pl.BlockSpec(memory_space=pltpu.MemorySpace.SMEM),  # scale
        ],
        out_specs=pl.BlockSpec(memory_space=vmem),
        compiler_params=pltpu.CompilerParams(
            vmem_limit_bytes=32 * 1024 * 1024),
        cost_estimate=pl.CostEstimate(flops=flops,
                                      transcendentals=2 * B,
                                      bytes_accessed=bytes_accessed),
    )(text, image_flat,
      prepared["wt_enc"], prepared["bt_enc"],
      prepared["wi_enc"], prepared["bi_enc"],
      prepared["wt_proj"], prepared["wi_proj"],
      prepared["scale"])

    return logits, logits.T


# ----------------------------------------------------------------------------
# Pure-JAX reference (sanity check)
# ----------------------------------------------------------------------------
def clip_forward_ref(params, text, image):
    et = jnp.maximum(text @ params["txt_enc_w"].T + params["txt_enc_b"], 0.0)
    img_flat = image.reshape(image.shape[0], -1)
    ei = jnp.maximum(img_flat @ params["img_enc_w"].T + params["img_enc_b"],
                     0.0)
    pt = et @ params["txt_proj_w"].T
    pi = ei @ params["img_proj_w"].T
    pt = pt / jnp.maximum(jnp.linalg.norm(pt, axis=1, keepdims=True), 1e-12)
    pi = pi / jnp.maximum(jnp.linalg.norm(pi, axis=1, keepdims=True), 1e-12)
    scale = jnp.clip(jnp.exp(params["temperature"]), 0.01, 100.0)
    logits = (pt @ pi.T) * scale
    return logits, logits.T


# ----------------------------------------------------------------------------
# Main
# ----------------------------------------------------------------------------
if __name__ == "__main__":
    key = jax.random.PRNGKey(0)

    # Small shapes consistent with the module's forward.
    batch = 2
    txt_in_dim = 48          # text feature input size for the synthetic encoder
    C, H, W = 4, 16, 16      # NCHW image
    txt_out_dim = 32         # txt_encoder.config.out_dim
    img_out_dim = 32         # img_encoder.config.out_dim
    embd_dim = 16
    temperature = 0.07       # > 0, as asserted in __init__

    keys = jax.random.split(key, 8)
    params = {
        # synthetic text encoder: Linear(txt_in_dim -> txt_out_dim) + ReLU
        # TODO(synk): txt_encoder / img_encoder are injected submodules in the
        # PyTorch code; simple Linear+ReLU stand-ins are used here.
        "txt_enc_w": 0.05 * jax.random.normal(keys[0], (txt_out_dim, txt_in_dim),
                                              jnp.float32),
        "txt_enc_b": 0.05 * jax.random.normal(keys[1], (txt_out_dim,),
                                              jnp.float32),
        # synthetic image encoder: Linear(C*H*W -> img_out_dim) + ReLU
        "img_enc_w": 0.05 * jax.random.normal(keys[2], (img_out_dim, C * H * W),
                                              jnp.float32),
        "img_enc_b": 0.05 * jax.random.normal(keys[3], (img_out_dim,),
                                              jnp.float32),
        # CLIP projection heads (nn.Linear, bias=False): weight is (E, in_dim)
        "txt_proj_w": 0.05 * jax.random.normal(keys[4], (embd_dim, txt_out_dim),
                                               jnp.float32),
        "img_proj_w": 0.05 * jax.random.normal(keys[5], (embd_dim, img_out_dim),
                                               jnp.float32),
        # temperature parameter initialized to log(1 / temperature)
        "temperature": jnp.log(jnp.asarray(1.0 / temperature, jnp.float32)),
    }

    text = jax.random.normal(keys[6], (batch, txt_in_dim), jnp.float32)
    image = jax.random.normal(keys[7], (batch, C, H, W), jnp.float32)

    prepared = prepare_params(params)
    logits, logits_t = clip_forward(prepared, text, image)
    jax.block_until_ready((logits, logits_t))

    # Sanity check against pure-JAX reference.
    ref_logits, ref_logits_t = clip_forward_ref(params, text, image)
    assert jnp.allclose(logits, ref_logits, atol=1e-4, rtol=1e-4)
    assert jnp.allclose(logits_t, ref_logits_t, atol=1e-4, rtol=1e-4)
    assert jnp.allclose(logits, logits_t.T, atol=1e-6)

    print("KERNEL_OK")
</pallas_src>

<mosaic_0001>
module attributes {stable_mosaic.version = 11 : i64} {
  func.func @_clip_fused_kernel(%arg0: memref<2x48xf32, #tpu.memory_space<vmem>>, %arg1: memref<2x1024xf32, #tpu.memory_space<vmem>>, %arg2: memref<48x32xf32, #tpu.memory_space<vmem>>, %arg3: memref<1x32xf32, #tpu.memory_space<vmem>>, %arg4: memref<1024x32xf32, #tpu.memory_space<vmem>>, %arg5: memref<1x32xf32, #tpu.memory_space<vmem>>, %arg6: memref<32x16xf32, #tpu.memory_space<vmem>>, %arg7: memref<32x16xf32, #tpu.memory_space<vmem>>, %arg8: memref<1xf32, #tpu.memory_space<smem>>, %arg9: memref<2x2xf32, #tpu.memory_space<vmem>>) attributes {dimension_semantics = [], scalar_prefetch = 0 : i64, scratch_operands = 0 : i64, tpu.core_type = #tpu.core_type<tc>} {
    %c0 = arith.constant 0 : index
    %c0_0 = arith.constant 0 : index
    %0 = vector.load %arg0[%c0, %c0_0] : memref<2x48xf32, #tpu.memory_space<vmem>>, vector<2x48xf32>
    %c0_1 = arith.constant 0 : index
    %c0_2 = arith.constant 0 : index
    %1 = vector.load %arg2[%c0_1, %c0_2] : memref<48x32xf32, #tpu.memory_space<vmem>>, vector<48x32xf32>
    %cst = arith.constant dense<0.000000e+00> : vector<2x32xf32>
    %2 = tpu.matmul %0, %1, %cst {dimension_numbers = #tpu.dot_dimension_numbers<[1], [0], [0], [1], [0, 0, 1, 1], [], []>} : vector<2x48xf32>, vector<48x32xf32>, vector<2x32xf32> -> vector<2x32xf32>
    %c0_3 = arith.constant 0 : index
    %c0_4 = arith.constant 0 : index
    %3 = vector.load %arg3[%c0_3, %c0_4] : memref<1x32xf32, #tpu.memory_space<vmem>>, vector<1x32xf32>
    %4 = vector.broadcast %3 : vector<1x32xf32> to vector<2x32xf32>
    %5 = arith.addf %2, %4 : vector<2x32xf32>
    %cst_5 = arith.constant 0.000000e+00 : f32
    %6 = vector.broadcast %cst_5 : f32 to vector<2x32xf32>
    %7 = arith.maximumf %5, %6 : vector<2x32xf32>
    %c0_6 = arith.constant 0 : index
    %c0_7 = arith.constant 0 : index
    %8 = vector.load %arg1[%c0_6, %c0_7] : memref<2x1024xf32, #tpu.memory_space<vmem>>, vector<2x1024xf32>
    %c0_8 = arith.constant 0 : index
    %c0_9 = arith.constant 0 : index
    %9 = vector.load %arg4[%c0_8, %c0_9] : memref<1024x32xf32, #tpu.memory_space<vmem>>, vector<1024x32xf32>
    %cst_10 = arith.constant dense<0.000000e+00> : vector<2x32xf32>
    %10 = tpu.matmul %8, %9, %cst_10 {dimension_numbers = #tpu.dot_dimension_numbers<[1], [0], [0], [1], [0, 0, 1, 1], [], []>} : vector<2x1024xf32>, vector<1024x32xf32>, vector<2x32xf32> -> vector<2x32xf32>
    %c0_11 = arith.constant 0 : index
    %c0_12 = arith.constant 0 : index
    %11 = vector.load %arg5[%c0_11, %c0_12] : memref<1x32xf32, #tpu.memory_space<vmem>>, vector<1x32xf32>
    %12 = vector.broadcast %11 : vector<1x32xf32> to vector<2x32xf32>
    %13 = arith.addf %10, %12 : vector<2x32xf32>
    %cst_13 = arith.constant 0.000000e+00 : f32
    %14 = vector.broadcast %cst_13 : f32 to vector<2x32xf32>
    %15 = arith.maximumf %13, %14 : vector<2x32xf32>
    %c0_14 = arith.constant 0 : index
    %c0_15 = arith.constant 0 : index
    %16 = vector.load %arg6[%c0_14, %c0_15] : memref<32x16xf32, #tpu.memory_space<vmem>>, vector<32x16xf32>
    %cst_16 = arith.constant dense<0.000000e+00> : vector<2x16xf32>
    %17 = tpu.matmul %7, %16, %cst_16 {dimension_numbers = #tpu.dot_dimension_numbers<[1], [0], [0], [1], [0, 0, 1, 1], [], []>} : vector<2x32xf32>, vector<32x16xf32>, vector<2x16xf32> -> vector<2x16xf32>
    %c0_17 = arith.constant 0 : index
    %c0_18 = arith.constant 0 : index
    %18 = vector.load %arg7[%c0_17, %c0_18] : memref<32x16xf32, #tpu.memory_space<vmem>>, vector<32x16xf32>
    %cst_19 = arith.constant dense<0.000000e+00> : vector<2x16xf32>
    %19 = tpu.matmul %15, %18, %cst_19 {dimension_numbers = #tpu.dot_dimension_numbers<[1], [0], [0], [1], [0, 0, 1, 1], [], []>} : vector<2x32xf32>, vector<32x16xf32>, vector<2x16xf32> -> vector<2x16xf32>
    %c0_20 = arith.constant 0 : index
    %20 = memref.load %arg8[%c0_20] : memref<1xf32, #tpu.memory_space<smem>>
    %21 = arith.mulf %17, %17 : vector<2x16xf32>
    %cst_21 = arith.constant dense<0.000000e+00> : vector<2xf32>
    %22 = vector.multi_reduction <add>, %21, %cst_21 [1] : vector<2x16xf32> to vector<2xf32>
    %23 = vector.shape_cast %22 : vector<2xf32> to vector<2x1xf32>
    %cst_22 = arith.constant 1.000000e-24 : f32
    %24 = vector.broadcast %cst_22 : f32 to vector<2x1xf32>
    %25 = arith.maximumf %23, %24 : vector<2x1xf32>
    %26 = math.rsqrt %25 : vector<2x1xf32>
    %27 = vector.broadcast %20 : f32 to vector<2x1xf32>
    %28 = arith.mulf %27, %26 : vector<2x1xf32>
    %29 = arith.mulf %19, %19 : vector<2x16xf32>
    %cst_23 = arith.constant dense<0.000000e+00> : vector<2xf32>
    %30 = vector.multi_reduction <add>, %29, %cst_23 [1] : vector<2x16xf32> to vector<2xf32>
    %31 = vector.shape_cast %30 : vector<2xf32> to vector<2x1xf32>
    %cst_24 = arith.constant 1.000000e-24 : f32
    %32 = vector.broadcast %cst_24 : f32 to vector<2x1xf32>
    %33 = arith.maximumf %31, %32 : vector<2x1xf32>
    %34 = math.rsqrt %33 : vector<2x1xf32>
    %35 = vector.broadcast %28 : vector<2x1xf32> to vector<2x16xf32>
    %36 = arith.mulf %17, %35 : vector<2x16xf32>
    %37 = vector.broadcast %34 : vector<2x1xf32> to vector<2x16xf32>
    %38 = arith.mulf %19, %37 : vector<2x16xf32>
    %cst_25 = arith.constant dense<0.000000e+00> : vector<2x2xf32>
    %39 = tpu.matmul %36, %38, %cst_25 {dimension_numbers = #tpu.dot_dimension_numbers<[1], [1], [0], [0], [0, 0, 1, 0], [], []>} : vector<2x16xf32>, vector<2x16xf32>, vector<2x2xf32> -> vector<2x2xf32>
    %c0_26 = arith.constant 0 : index
    %c0_27 = arith.constant 0 : index
    %40 = vector.load %arg9[%c0_26, %c0_27] : memref<2x2xf32, #tpu.memory_space<vmem>>, vector<2x2xf32>
    tpu.vector_store %arg9[%c0_26, %c0_27], %39 {strides = array<i32>} : memref<2x2xf32, #tpu.memory_space<vmem>>, vector<2x2xf32>,
    return
  }
}

</mosaic_0001>

<llo_original>
// kernel: clip_forward.1
$region0: #{clip_forward.1}
  #allocation0 [shape = 'u32[]', space=smem, size = 0x4, offset = 0x4, fixed_abs, tag = 'smem constant byte address 0x4 - core index']
  #allocation1 [shape = 'u32[144,128]{1,0:T(1,128)}', space=vmem, size = 0x12000, scoped, tag = 'internal scratch']
  #allocation2 [shape = 'f32[1]{0:T(128)S(6)}', space=smem, size = 0x200, scoped, tag = 'scoped memory for clip_forward.1']
  %s0 = inlined_call_operand.vmem [shape: f32[2,48], index: 0, kind: input, shape index: {}]
  %s1 = inlined_call_operand.vmem [shape: f32[2,1024], index: 1, kind: input, shape index: {}]
  %s2 = inlined_call_operand.vmem [shape: f32[48,32], index: 2, kind: input, shape index: {}]
  %s3 = inlined_call_operand.vmem [shape: f32[1,32], index: 3, kind: input, shape index: {}]
  %s4 = inlined_call_operand.vmem [shape: f32[1024,32], index: 4, kind: input, shape index: {}]
  %s5 = inlined_call_operand.vmem [shape: f32[1,32], index: 5, kind: input, shape index: {}]
  %s6 = inlined_call_operand.vmem [shape: f32[32,16], index: 6, kind: input, shape index: {}]
  %s7 = inlined_call_operand.vmem [shape: f32[32,16], index: 7, kind: input, shape index: {}]
  %s8 = inlined_call_operand.<no memory space> [shape: f32[1], index: 8, kind: input, shape index: {}]
  %s9 = inlined_call_operand.vmem [shape: f32[2,2], index: 9, kind: output, shape index: {}]
  %s10 = sld [smem:[#allocation0]]
  $region46: #{clip_forward.1} parent=0
    _
  %s12 = ssub.s32 1, %s10
  %s13 = scalar_select 0, %s12, %s10
  %14 = sst [smem:[#allocation2]] %s8
  // Predicated region
  $region2: #{clip_forward.1} parent=0 // pred_check
    _
  $region3: #{clip_forward.1} parent=0 // pred_check_branch
    %16 = sbr.rel (0) target = $region5
  $region4: #{clip_forward.1} parent=0 // pred_region
    _
  $region5: #{clip_forward.1} parent=0 // pred_fallthru
    _
  // Predicated region
  $region6: #{clip_forward.1} parent=0 // pred_check
    _
  $region7: #{clip_forward.1} parent=0 // pred_check_branch
    %18 = sbr.rel (0) target = $region9
  $region8: #{clip_forward.1} parent=0 // pred_region
    _
  $region9: #{clip_forward.1} parent=0 // pred_fallthru
    _
  // Predicated region
  $region10: #{clip_forward.1} parent=0 // pred_check
    _
  $region11: #{clip_forward.1} parent=0 // pred_check_branch
    %20 = sbr.rel (0) target = $region13
  $region12: #{clip_forward.1} parent=0 // pred_region
    _
  $region13: #{clip_forward.1} parent=0 // pred_fallthru
    _
  // Predicated region
  $region14: #{clip_forward.1} parent=0 // pred_check
    _
  $region15: #{clip_forward.1} parent=0 // pred_check_branch
    %22 = sbr.rel (0) target = $region17
  $region16: #{clip_forward.1} parent=0 // pred_region
    _
  $region17: #{clip_forward.1} parent=0 // pred_fallthru
    _
  // Predicated region
  $region18: #{clip_forward.1} parent=0 // pred_check
    _
  $region19: #{clip_forward.1} parent=0 // pred_check_branch
    %24 = sbr.rel (0) target = $region21
  $region20: #{clip_forward.1} parent=0 // pred_region
    _
  $region21: #{clip_forward.1} parent=0 // pred_fallthru
    _
  // Predicated region
  $region22: #{clip_forward.1} parent=0 // pred_check
    _
  $region23: #{clip_forward.1} parent=0 // pred_check_branch
    %26 = sbr.rel (0) target = $region25
  $region24: #{clip_forward.1} parent=0 // pred_region
    _
  $region25: #{clip_forward.1} parent=0 // pred_fallthru
    _
  // Predicated region
  $region26: #{clip_forward.1} parent=0 // pred_check
    _
  $region27: #{clip_forward.1} parent=0 // pred_check_branch
    %28 = sbr.rel (0) target = $region29
  $region28: #{clip_forward.1} parent=0 // pred_region
    _
  $region29: #{clip_forward.1} parent=0 // pred_fallthru
    _
  // Predicated region
  $region30: #{clip_forward.1} parent=0 // pred_check
    _
  $region31: #{clip_forward.1} parent=0 // pred_check_branch
    %30 = sbr.rel (0) target = $region33
  $region32: #{clip_forward.1} parent=0 // pred_region
    _
  $region33: #{clip_forward.1} parent=0 // pred_fallthru
    _
  // Predicated region
  $region34: #{clip_forward.1} parent=0 // pred_check
    _
  $region35: #{clip_forward.1} parent=0 // pred_check_branch
    %32 = sbr.rel (0) target = $region37
  $region36: #{clip_forward.1} parent=0 // pred_region
    _
  $region37: #{clip_forward.1} parent=0 // pred_fallthru
    _
  %v33 = vld [vmem:[%s0] sm:$0x3]
  %v34 = vld [vmem:[%s2] sm:$0xff]
  %v35 = vld [vmem:[%s2 + $0x8] sm:$0xff]
  %v36 = vld [vmem:[%s2 + $0x10] sm:$0xff]
  %v37 = vld [vmem:[%s2 + $0x18] sm:$0xff]
  %v38 = vld [vmem:[%s2 + $0x20] sm:$0xff]
  %v39 = vld [vmem:[%s2 + $0x28] sm:$0xff]
  %v40 = vld [vmem:[%s3] sm:$0x1]
  %v42 = vlaneseq
  %v43 = vshrl.u32 %v42, 7
  %v44 = vsub.s32 0, %v43
  %v45 = vrot.slane %v40, %v44
  %vm47 = vcmask 392192
  %v49 = vsel %vm47, %v33, 0
  %51 = vmatprep.subr.mxu0 0.0
  %52 = vmatpush1.msra.mxu0 %v34
  %53 = vmatprep.subr.mxu0 0.0
  %54 = vmatpush1.msra.mxu0 %v35
  %55 = vmatprep.subr.mxu0 0.0
  %56 = vmatpush1.msra.mxu0 %v36
  %57 = vmatprep.subr.mxu0 0.0
  %58 = vmatpush1.msra.mxu0 %v37
  %59 = vmatprep.subr.mxu0 0.0
  %60 = vmatpush1.msra.mxu0 %v38
  %61 = vmatprep.subr.mxu0 0.0
  %62 = vmatpush1.msra.mxu0 %v39
  %63 = vmatprep.subr.mxu0 0.0
  %64 = vmatpush1.msra.mxu0 0.0
  %65 = vmatprep.subr.mxu0 0.0
  %66 = vmatpush1.msra.mxu0 0.0
  %67 = vmatprep.subr.mxu0 0.0
  %68 = vmatpush1.msra.mxu0 0.0
  %69 = vmatprep.subr.mxu0 0.0
  %70 = vmatpush1.msra.mxu0 0.0
  %71 = vmatprep.subr.mxu0 0.0
  %72 = vmatpush1.msra.mxu0 0.0
  %73 = vmatprep.subr.mxu0 0.0
  %74 = vmatpush1.msra.mxu0 0.0
  %75 = vmatprep.subr.mxu0 0.0
  %76 = vmatpush1.msra.mxu0 0.0
  %77 = vmatprep.subr.mxu0 0.0
  %78 = vmatpush1.msra.mxu0 0.0
  %79 = vmatprep.subr.mxu0 0.0
  %80 = vmatpush1.msra.mxu0 0.0
  %81 = vmatprep.subr.mxu0 0.0
  %82 = vmatpush1.msra.mxu0 0.0
  %83 = vmatprep.subr.mxu0 0.0
  %84 = vmatpush1.msra.mxu0 0.0
  %85 = vmatprep.subr.mxu0 0.0
  %86 = vmatpush1.msra.mxu0 0.0
  %87 = vmatprep.subr.mxu0 0.0
  %88 = vmatpush1.msra.mxu0 0.0
  %89 = vmatprep.subr.mxu0 0.0
  %90 = vmatpush1.msra.mxu0 0.0
  %91 = vmatprep.subr.mxu0 0.0
  %92 = vmatpush1.msra.mxu0 0.0
  %93 = vmatprep.subr.mxu0 0.0
  %94 = vmatpush1.msra.mxu0 0.0
  %95 = vmatprep.subr.mxu0 0.0
  %96 = vmatpush1.msra.mxu0 0.0
  %97 = vmatprep.subr.mxu0 0.0
  %98 = vmatpush1.msra.mxu0 0.0
  %99 = vmatprep.subr.mxu0 0.0
  %100 = vmatpush1.msra.mxu0 0.0
  %101 = vmatprep.subr.mxu0 0.0
  %102 = vmatpush1.msra.mxu0 0.0
  %103 = vmatprep.subr.mxu0 0.0
  %104 = vmatpush1.msra.mxu0 0.0
  %105 = vmatprep.subr.mxu0 0.0
  %106 = vmatpush1.msra.mxu0 0.0
  %107 = vmatprep.subr.mxu0 0.0
  %108 = vmatpush1.msra.mxu0 0.0
  %109 = vmatprep.subr.mxu0 0.0
  %110 = vmatpush1.msra.mxu0 0.0
  %111 = vmatprep.subr.mxu0 0.0
  %112 = vmatpush1.msra.mxu0 0.0
  %113 = vmatprep.subr.mxu0 0.0
  %114 = vmatpush1.msra.mxu0 0.0
  %115 = vmatprep.mubr.f32.mxu0 0.0
  %116 = vmatmul.mubr.f32.gmra.mrb[0].mxu0 %v49
  %v117 = vpop.f32.mrb[0].mxu0
  %v118 = vadd.f32 %v45, %v117
  %v119 = vpop.f32.mrb[0].mxu0
  %120 = vdwg.mxu0
  %v121 = vmax.f32 %v118, 0.0
  %v122 = vld [vmem:[%s1] sm:$0xff]
  %v123 = vld [vmem:[%s1 + $0x8] sm:$0xff]
  %v124 = vld [vmem:[%s4] sm:$0xff]
  %v125 = vld [vmem:[%s4 + $0x8] sm:$0xff]
  %v126 = vld [vmem:[%s4 + $0x10] sm:$0xff]
  %v127 = vld [vmem:[%s4 + $0x18] sm:$0xff]
  %v128 = vld [vmem:[%s4 + $0x20] sm:$0xff]
  %v129 = vld [vmem:[%s4 + $0x28] sm:$0xff]
  %v130 = vld [vmem:[%s4 + $0x30] sm:$0xff]
  %v131 = vld [vmem:[%s4 + $0x38] sm:$0xff]
  %v132 = vld [vmem:[%s4 + $0x40] sm:$0xff]
  %v133 = vld [vmem:[%s4 + $0x48] sm:$0xff]
  %v134 = vld [vmem:[%s4 + $0x50] sm:$0xff]
  %v135 = vld [vmem:[%s4 + $0x58] sm:$0xff]
  %v136 = vld [vmem:[%s4 + $0x60] sm:$0xff]
  %v137 = vld [vmem:[%s4 + $0x68] sm:$0xff]
  %v138 = vld [vmem:[%s4 + $0x70] sm:$0xff]
  %v139 = vld [vmem:[%s4 + $0x78] sm:$0xff]
  %v140 = vld [vmem:[%s4 + $0x80] sm:$0xff]
  %v141 = vld [vmem:[%s4 + $0x88] sm:$0xff]
  %v142 = vld [vmem:[%s4 + $0x90] sm:$0xff]
  %v143 = vld [vmem:[%s4 + $0x98] sm:$0xff]
  %v144 = vld [vmem:[%s4 + $0xa0] sm:$0xff]
  %v145 = vld [vmem:[%s4 + $0xa8] sm:$0xff]
  %v146 = vld [vmem:[%s4 + $0xb0] sm:$0xff]
  %v147 = vld [vmem:[%s4 + $0xb8] sm:$0xff]
  %v148 = vld [vmem:[%s4 + $0xc0] sm:$0xff]
  %v149 = vld [vmem:[%s4 + $0xc8] sm:$0xff]
  %v150 = vld [vmem:[%s4 + $0xd0] sm:$0xff]
  %v151 = vld [vmem:[%s4 + $0xd8] sm:$0xff]
  %v152 = vld [vmem:[%s4 + $0xe0] sm:$0xff]
  %v153 = vld [vmem:[%s4 + $0xe8] sm:$0xff]
  %v154 = vld [vmem:[%s4 + $0xf0] sm:$0xff]
  %v155 = vld [vmem:[%s4 + $0xf8] sm:$0xff]
  %v156 = vld [vmem:[%s4 + $0x100] sm:$0xff]
  %v157 = vld [vmem:[%s4 + $0x108] sm:$0xff]
  %v158 = vld [vmem:[%s4 + $0x110] sm:$0xff]
  %v159 = vld [vmem:[%s4 + $0x118] sm:$0xff]
  %v160 = vld [vmem:[%s4 + $0x120] sm:$0xff]
  %v161 = vld [vmem:[%s4 + $0x128] sm:$0xff]
  %v162 = vld [vmem:[%s4 + $0x130] sm:$0xff]
  %v163 = vld [vmem:[%s4 + $0x138] sm:$0xff]
  %v164 = vld [vmem:[%s4 + $0x140] sm:$0xff]
  %v165 = vld [vmem:[%s4 + $0x148] sm:$0xff]
  %v166 = vld [vmem:[%s4 + $0x150] sm:$0xff]
  %v167 = vld [vmem:[%s4 + $0x158] sm:$0xff]
  %v168 = vld [vmem:[%s4 + $0x160] sm:$0xff]
  %v169 = vld [vmem:[%s4 + $0x168] sm:$0xff]
  %v170 = vld [vmem:[%s4 + $0x170] sm:$0xff]
  %v171 = vld [vmem:[%s4 + $0x178] sm:$0xff]
  %v172 = vld [vmem:[%s4 + $0x180] sm:$0xff]
  %v173 = vld [vmem:[%s4 + $0x188] sm:$0xff]
  %v174 = vld [vmem:[%s4 + $0x190] sm:$0xff]
  %v175 = vld [vmem:[%s4 + $0x198] sm:$0xff]
  %v176 = vld [vmem:[%s4 + $0x1a0] sm:$0xff]
  %v177 = vld [vmem:[%s4 + $0x1a8] sm:$0xff]
  %v178 = vld [vmem:[%s4 + $0x1b0] sm:$0xff]
  %v179 = vld [vmem:[%s4 + $0x1b8] sm:$0xff]
  %v180 = vld [vmem:[%s4 + $0x1c0] sm:$0xff]
  %v181 = vld [vmem:[%s4 + $0x1c8] sm:$0xff]
  %v182 = vld [vmem:[%s4 + $0x1d0] sm:$0xff]
  %v183 = vld [vmem:[%s4 + $0x1d8] sm:$0xff]
  %v184 = vld [vmem:[%s4 + $0x1e0] sm:$0xff]
  %v185 = vld [vmem:[%s4 + $0x1e8] sm:$0xff]
  %v186 = vld [vmem:[%s4 + $0x1f0] sm:$0xff]
  %v187 = vld [vmem:[%s4 + $0x1f8] sm:$0xff]
  %v188 = vld [vmem:[%s4 + $0x200] sm:$0xff]
  %v189 = vld [vmem:[%s4 + $0x208] sm:$0xff]
  %v190 = vld [vmem:[%s4 + $0x210] sm:$0xff]
  %v191 = vld [vmem:[%s4 + $0x218] sm:$0xff]
  %v192 = vld [vmem:[%s4 + $0x220] sm:$0xff]
  %v193 = vld [vmem:[%s4 + $0x228] sm:$0xff]
  %v194 = vld [vmem:[%s4 + $0x230] sm:$0xff]
  %v195 = vld [vmem:[%s4 + $0x238] sm:$0xff]
  %v196 = vld [vmem:[%s4 + $0x240] sm:$0xff]
  %v197 = vld [vmem:[%s4 + $0x248] sm:$0xff]
  %v198 = vld [vmem:[%s4 + $0x250] sm:$0xff]
  %v199 = vld [vmem:[%s4 + $0x258] sm:$0xff]
  %v200 = vld [vmem:[%s4 + $0x260] sm:$0xff]
  %v201 = vld [vmem:[%s4 + $0x268] sm:$0xff]
  %v202 = vld [vmem:[%s4 + $0x270] sm:$0xff]
  %v203 = vld [vmem:[%s4 + $0x278] sm:$0xff]
  %v204 = vld [vmem:[%s4 + $0x280] sm:$0xff]
  %v205 = vld [vmem:[%s4 + $0x288] sm:$0xff]
  %v206 = vld [vmem:[%s4 + $0x290] sm:$0xff]
  %v207 = vld [vmem:[%s4 + $0x298] sm:$0xff]
  %v208 = vld [vmem:[%s4 + $0x2a0] sm:$0xff]
  %v209 = vld [vmem:[%s4 + $0x2a8] sm:$0xff]
  %v210 = vld [vmem:[%s4 + $0x2b0] sm:$0xff]
  %v211 = vld [vmem:[%s4 + $0x2b8] sm:$0xff]
  %v212 = vld [vmem:[%s4 + $0x2c0] sm:$0xff]
  %v213 = vld [vmem:[%s4 + $0x2c8] sm:$0xff]
  %v214 = vld [vmem:[%s4 + $0x2d0] sm:$0xff]
  %v215 = vld [vmem:[%s4 + $0x2d8] sm:$0xff]
  %v216 = vld [vmem:[%s4 + $0x2e0] sm:$0xff]
  %v217 = vld [vmem:[%s4 + $0x2e8] sm:$0xff]
  %v218 = vld [vmem:[%s4 + $0x2f0] sm:$0xff]
  %v219 = vld [vmem:[%s4 + $0x2f8] sm:$0xff]
  %v220 = vld [vmem:[%s4 + $0x300] sm:$0xff]
  %v221 = vld [vmem:[%s4 + $0x308] sm:$0xff]
  %v222 = vld [vmem:[%s4 + $0x310] sm:$0xff]
  %v223 = vld [vmem:[%s4 + $0x318] sm:$0xff]
  %v224 = vld [vmem:[%s4 + $0x320] sm:$0xff]
  %v225 = vld [vmem:[%s4 + $0x328] sm:$0xff]
  %v226 = vld [vmem:[%s4 + $0x330] sm:$0xff]
  %v227 = vld [vmem:[%s4 + $0x338] sm:$0xff]
  %v228 = vld [vmem:[%s4 + $0x340] sm:$0xff]
  %v229 = vld [vmem:[%s4 + $0x348] sm:$0xff]
  %v230 = vld [vmem:[%s4 + $0x350] sm:$0xff]
  %v231 = vld [vmem:[%s4 + $0x358] sm:$0xff]
  %v232 = vld [vmem:[%s4 + $0x360] sm:$0xff]
  %v233 = vld [vmem:[%s4 + $0x368] sm:$0xff]
  %v234 = vld [vmem:[%s4 + $0x370] sm:$0xff]
  %v235 = vld [vmem:[%s4 + $0x378] sm:$0xff]
  %v236 = vld [vmem:[%s4 + $0x380] sm:$0xff]
  %v237 = vld [vmem:[%s4 + $0x388] sm:$0xff]
  %v238 = vld [vmem:[%s4 + $0x390] sm:$0xff]
  %v239 = vld [vmem:[%s4 + $0x398] sm:$0xff]
  %v240 = vld [vmem:[%s4 + $0x3a0] sm:$0xff]
  %v241 = vld [vmem:[%s4 + $0x3a8] sm:$0xff]
  %v242 = vld [vmem:[%s4 + $0x3b0] sm:$0xff]
  %v243 = vld [vmem:[%s4 + $0x3b8] sm:$0xff]
  %v244 = vld [vmem:[%s4 + $0x3c0] sm:$0xff]
  %v245 = vld [vmem:[%s4 + $0x3c8] sm:$0xff]
  %v246 = vld [vmem:[%s4 + $0x3d0] sm:$0xff]
  %v247 = vld [vmem:[%s4 + $0x3d8] sm:$0xff]
  %v248 = vld [vmem:[%s4 + $0x3e0] sm:$0xff]
  %v249 = vld [vmem:[%s4 + $0x3e8] sm:$0xff]
  %v250 = vld [vmem:[%s4 + $0x3f0] sm:$0xff]
  %v251 = vld [vmem:[%s4 + $0x3f8] sm:$0xff]
  %v252 = vld [vmem:[%s5] sm:$0x1]
  %v254 = vlaneseq
  %v255 = vshrl.u32 %v254, 7
  %v256 = vsub.s32 0, %v255
  %v257 = vrot.slane %v252, %v256
  %v261 = vcombine.high %v122, %v122
  %v263 = vunpack.c.l.s4 1983009808
  %v264 = vunpack.c.0.s8 %v263
  %v265 = vlaneseq
  %v266 = vshrl.u32 %v265, 7
  %v267 = vsub.s32 %v264, %v266
  %v268 = vrot.slane %v122, %v267
  %v270 = vunpack.c.l.s4 1983009808
  %v271 = vunpack.c.0.s8 %v270
  %v272 = vlaneseq
  %v273 = vshrl.u32 %v272, 7
  %v274 = vsub.s32 %v271, %v273
  %v275 = vrot.slane %v261, %v274
  %v276 = vcombine.high %v268, %v268
  %v277 = vcombine.high %v275, %v275
  %v278 = vcombine.high %v123, %v123
  %v280 = vunpack.c.l.s4 1983009808
  %v281 = vunpack.c.0.s8 %v280
  %v282 = vlaneseq
  %v283 = vshrl.u32 %v282, 7
  %v284 = vsub.s32 %v281, %v283
  %v285 = vrot.slane %v123, %v284
  %v287 = vunpack.c.l.s4 1983009808
  %v288 = vunpack.c.0.s8 %v287
  %v289 = vlaneseq
  %v290 = vshrl.u32 %v289, 7
  %v291 = vsub.s32 %v288, %v290
  %v292 = vrot.slane %v278, %v291
  %v293 = vcombine.high %v285, %v285
  %v294 = vcombine.high %v292, %v292
  %303 = vmatprep.subr.mxu0 0.0
  %304 = vmatpush1.msra.mxu0 %v124
  %305 = vmatprep.subr.mxu0 0.0
  %306 = vmatpush1.msra.mxu0 %v125
  %307 = vmatprep.subr.mxu0 0.0
  %308 = vmatpush1.msra.mxu0 %v126
  %309 = vmatprep.subr.mxu0 0.0
  %310 = vmatpush1.msra.mxu0 %v127
  %311 = vmatprep.subr.mxu0 0.0
  %312 = vmatpush1.msra.mxu0 %v128
  %313 = vmatprep.subr.mxu0 0.0
  %314 = vmatpush1.msra.mxu0 %v129
  %315 = vmatprep.subr.mxu0 0.0
  %316 = vmatpush1.msra.mxu0 %v130
  %317 = vmatprep.subr.mxu0 0.0
  %318 = vmatpush1.msra.mxu0 %v131
  %319 = vmatprep.subr.mxu0 0.0
  %320 = vmatpush1.msra.mxu0 %v132
  %321 = vmatprep.subr.mxu0 0.0
  %322 = vmatpush1.msra.mxu0 %v133
  %323 = vmatprep.subr.mxu0 0.0
  %324 = vmatpush1.msra.mxu0 %v134
  %325 = vmatprep.subr.mxu0 0.0
  %326 = vmatpush1.msra.mxu0 %v135
  %327 = vmatprep.subr.mxu0 0.0
  %328 = vmatpush1.msra.mxu0 %v136
  %329 = vmatprep.subr.mxu0 0.0
  %330 = vmatpush1.msra.mxu0 %v137
  %331 = vmatprep.subr.mxu0 0.0
  %332 = vmatpush1.msra.mxu0 %v138
  %333 = vmatprep.subr.mxu0 0.0
  %334 = vmatpush1.msra.mxu0 %v139
  %335 = vmatprep.subr.mxu0 0.0
  %336 = vmatpush1.msra.mxu0 %v140
  %337 = vmatprep.subr.mxu0 0.0
  %338 = vmatpush1.msra.mxu0 %v141
  %339 = vmatprep.subr.mxu0 0.0
  %340 = vmatpush1.msra.mxu0 %v142
  %341 = vmatprep.subr.mxu0 0.0
  %342 = vmatpush1.msra.mxu0 %v143
  %343 = vmatprep.subr.mxu0 0.0
  %344 = vmatpush1.msra.mxu0 %v144
  %345 = vmatprep.subr.mxu0 0.0
  %346 = vmatpush1.msra.mxu0 %v145
  %347 = vmatprep.subr.mxu0 0.0
  %348 = vmatpush1.msra.mxu0 %v146
  %349 = vmatprep.subr.mxu0 0.0
  %350 = vmatpush1.msra.mxu0 %v147
  %351 = vmatprep.subr.mxu0 0.0
  %352 = vmatpush1.msra.mxu0 %v148
  %353 = vmatprep.subr.mxu0 0.0
  %354 = vmatpush1.msra.mxu0 %v149
  %355 = vmatprep.subr.mxu0 0.0
  %356 = vmatpush1.msra.mxu0 %v150
  %357 = vmatprep.subr.mxu0 0.0
  %358 = vmatpush1.msra.mxu0 %v151
  %359 = vmatprep.subr.mxu0 0.0
  %360 = vmatpush1.msra.mxu0 %v152
  %361 = vmatprep.subr.mxu0 0.0
  %362 = vmatpush1.msra.mxu0 %v153
  %363 = vmatprep.subr.mxu0 0.0
  %364 = vmatpush1.msra.mxu0 %v154
  %365 = vmatprep.subr.mxu0 0.0
  %366 = vmatpush1.msra.mxu0 %v155
  %367 = vmatprep.mubr.f32.mxu0 %v276
  %368 = vmatmul.mubr.f32.gmra.mrb[0].mxu0 %v268
  %v369 = vpop.f32.mrb[0].mxu0
  %v370 = vadd.f32 %v257, %v369
  %v371 = vpop.f32.mrb[0].mxu0
  %372 = vdwg.mxu0
  %373 = vmatprep.subr.mxu0 0.0
  %374 = vmatpush1.msra.mxu0 %v156
  %375 = vmatprep.subr.mxu0 0.0
  %376 = vmatpush1.msra.mxu0 %v157
  %377 = vmatprep.subr.mxu0 0.0
  %378 = vmatpush1.msra.mxu0 %v158
  %379 = vmatprep.subr.mxu0 0.0
  %380 = vmatpush1.msra.mxu0 %v159
  %381 = vmatprep.subr.mxu0 0.0
  %382 = vmatpush1.msra.mxu0 %v160
  %383 = vmatprep.subr.mxu0 0.0
  %384 = vmatpush1.msra.mxu0 %v161
  %385 = vmatprep.subr.mxu0 0.0
  %386 = vmatpush1.msra.mxu0 %v162
  %387 = vmatprep.subr.mxu0 0.0
  %388 = vmatpush1.msra.mxu0 %v163
  %389 = vmatprep.subr.mxu0 0.0
  %390 = vmatpush1.msra.mxu0 %v164
  %391 = vmatprep.subr.mxu0 0.0
  %392 = vmatpush1.msra.mxu0 %v165
  %393 = vmatprep.subr.mxu0 0.0
  %394 = vmatpush1.msra.mxu0 %v166
  %395 = vmatprep.subr.mxu0 0.0
  %396 = vmatpush1.msra.mxu0 %v167
  %397 = vmatprep.subr.mxu0 0.0
  %398 = vmatpush1.msra.mxu0 %v168
  %399 = vmatprep.subr.mxu0 0.0
  %400 = vmatpush1.msra.mxu0 %v169
  %401 = vmatprep.subr.mxu0 0.0
  %402 = vmatpush1.msra.mxu0 %v170
  %403 = vmatprep.subr.mxu0 0.0
  %404 = vmatpush1.msra.mxu0 %v171
  %405 = vmatprep.subr.mxu0 0.0
  %406 = vmatpush1.msra.mxu0 %v172
  %407 = vmatprep.subr.mxu0 0.0
  %408 = vmatpush1.msra.mxu0 %v173
  %409 = vmatprep.subr.mxu0 0.0
  %410 = vmatpush1.msra.mxu0 %v174
  %411 = vmatprep.subr.mxu0 0.0
  %412 = vmatpush1.msra.mxu0 %v175
  %413 = vmatprep.subr.mxu0 0.0
  %414 = vmatpush1.msra.mxu0 %v176
  %415 = vmatprep.subr.mxu0 0.0
  %416 = vmatpush1.msra.mxu0 %v177
  %417 = vmatprep.subr.mxu0 0.0
  %418 = vmatpush1.msra.mxu0 %v178
  %419 = vmatprep.subr.mxu0 0.0
  %420 = vmatpush1.msra.mxu0 %v179
  %421 = vmatprep.subr.mxu0 0.0
  %422 = vmatpush1.msra.mxu0 %v180
  %423 = vmatprep.subr.mxu0 0.0
  %424 = vmatpush1.msra.mxu0 %v181
  %425 = vmatprep.subr.mxu0 0.0
  %426 = vmatpush1.msra.mxu0 %v182
  %427 = vmatprep.subr.mxu0 0.0
  %428 = vmatpush1.msra.mxu0 %v183
  %429 = vmatprep.subr.mxu0 0.0
  %430 = vmatpush1.msra.mxu0 %v184
  %431 = vmatprep.subr.mxu0 0.0
  %432 = vmatpush1.msra.mxu0 %v185
  %433 = vmatprep.subr.mxu0 0.0
  %434 = vmatpush1.msra.mxu0 %v186
  %435 = vmatprep.subr.mxu0 0.0
  %436 = vmatpush1.msra.mxu0 %v187
  %437 = vmatprep.mubr.f32.mxu0 %v277
  %438 = vmatmul.mubr.f32.gmra.mrb[0].mxu0 %v275
  %v439 = vpop.f32.mrb[0].mxu0
  %v440 = vadd.f32 %v370, %v439
  %v441 = vpop.f32.mrb[0].mxu0
  %442 = vdwg.mxu0
  %443 = vmatprep.subr.mxu0 0.0
  %444 = vmatpush1.msra.mxu0 %v188
  %445 = vmatprep.subr.mxu0 0.0
  %446 = vmatpush1.msra.mxu0 %v189
  %447 = vmatprep.subr.mxu0 0.0
  %448 = vmatpush1.msra.mxu0 %v190
  %449 = vmatprep.subr.mxu0 0.0
  %450 = vmatpush1.msra.mxu0 %v191
  %451 = vmatprep.subr.mxu0 0.0
  %452 = vmatpush1.msra.mxu0 %v192
  %453 = vmatprep.subr.mxu0 0.0
  %454 = vmatpush1.msra.mxu0 %v193
  %455 = vmatprep.subr.mxu0 0.0
  %456 = vmatpush1.msra.mxu0 %v194
  %457 = vmatprep.subr.mxu0 0.0
  %458 = vmatpush1.msra.mxu0 %v195
  %459 = vmatprep.subr.mxu0 0.0
  %460 = vmatpush1.msra.mxu0 %v196
  %461 = vmatprep.subr.mxu0 0.0
  %462 = vmatpush1.msra.mxu0 %v197
  %463 = vmatprep.subr.mxu0 0.0
  %464 = vmatpush1.msra.mxu0 %v198
  %465 = vmatprep.subr.mxu0 0.0
  %466 = vmatpush1.msra.mxu0 %v199
  %467 = vmatprep.subr.mxu0 0.0
  %468 = vmatpush1.msra.mxu0 %v200
  %469 = vmatprep.subr.mxu0 0.0
  %470 = vmatpush1.msra.mxu0 %v201
  %471 = vmatprep.subr.mxu0 0.0
  %472 = vmatpush1.msra.mxu0 %v202
  %473 = vmatprep.subr.mxu0 0.0
  %474 = vmatpush1.msra.mxu0 %v203
  %475 = vmatprep.subr.mxu0 0.0
  %476 = vmatpush1.msra.mxu0 %v204
  %477 = vmatprep.subr.mxu0 0.0
  %478 = vmatpush1.msra.mxu0 %v205
  %479 = vmatprep.subr.mxu0 0.0
  %480 = vmatpush1.msra.mxu0 %v206
  %481 = vmatprep.subr.mxu0 0.0
  %482 = vmatpush1.msra.mxu0 %v207
  %483 = vmatprep.subr.mxu0 0.0
  %484 = vmatpush1.msra.mxu0 %v208
  %485 = vmatprep.subr.mxu0 0.0
  %486 = vmatpush1.msra.mxu0 %v209
  %487 = vmatprep.subr.mxu0 0.0
  %488 = vmatpush1.msra.mxu0 %v210
  %489 = vmatprep.subr.mxu0 0.0
  %490 = vmatpush1.msra.mxu0 %v211
  %491 = vmatprep.subr.mxu0 0.0
  %492 = vmatpush1.msra.mxu0 %v212
  %493 = vmatprep.subr.mxu0 0.0
  %494 = vmatpush1.msra.mxu0 %v213
  %495 = vmatprep.subr.mxu0 0.0
  %496 = vmatpush1.msra.mxu0 %v214
  %497 = vmatprep.subr.mxu0 0.0
  %498 = vmatpush1.msra.mxu0 %v215
  %499 = vmatprep.subr.mxu0 0.0
  %500 = vmatpush1.msra.mxu0 %v216
  %501 = vmatprep.subr.mxu0 0.0
  %502 = vmatpush1.msra.mxu0 %v217
  %503 = vmatprep.subr.mxu0 0.0
  %504 = vmatpush1.msra.mxu0 %v218
  %505 = vmatprep.subr.mxu0 0.0
  %506 = vmatpush1.msra.mxu0 %v219
  %507 = vmatprep.mubr.f32.mxu0 %v293
  %508 = vmatmul.mubr.f32.gmra.mrb[0].mxu0 %v285
  %v509 = vpop.f32.mrb[0].mxu0
  %v510 = vadd.f32 %v440, %v509
  %v511 = vpop.f32.mrb[0].mxu0
  %512 = vdwg.mxu0
  %513 = vmatprep.subr.mxu0 0.0
  %514 = vmatpush1.msra.mxu0 %v220
  %515 = vmatprep.subr.mxu0 0.0
  %516 = vmatpush1.msra.mxu0 %v221
  %517 = vmatprep.subr.mxu0 0.0
  %518 = vmatpush1.msra.mxu0 %v222
  %519 = vmatprep.subr.mxu0 0.0
  %520 = vmatpush1.msra.mxu0 %v223
  %521 = vmatprep.subr.mxu0 0.0
  %522 = vmatpush1.msra.mxu0 %v224
  %523 = vmatprep.subr.mxu0 0.0
  %524 = vmatpush1.msra.mxu0 %v225
  %525 = vmatprep.subr.mxu0 0.0
  %526 = vmatpush1.msra.mxu0 %v226
  %527 = vmatprep.subr.mxu0 0.0
  %528 = vmatpush1.msra.mxu0 %v227
  %529 = vmatprep.subr.mxu0 0.0
  %530 = vmatpush1.msra.mxu0 %v228
  %531 = vmatprep.subr.mxu0 0.0
  %532 = vmatpush1.msra.mxu0 %v229
  %533 = vmatprep.subr.mxu0 0.0
  %534 = vmatpush1.msra.mxu0 %v230
  %535 = vmatprep.subr.mxu0 0.0
  %536 = vmatpush1.msra.mxu0 %v231
  %537 = vmatprep.subr.mxu0 0.0
  %538 = vmatpush1.msra.mxu0 %v232
  %539 = vmatprep.subr.mxu0 0.0
  %540 = vmatpush1.msra.mxu0 %v233
  %541 = vmatprep.subr.mxu0 0.0
  %542 = vmatpush1.msra.mxu0 %v234
  %543 = vmatprep.subr.mxu0 0.0
  %544 = vmatpush1.msra.mxu0 %v235
  %545 = vmatprep.subr.mxu0 0.0
  %546 = vmatpush1.msra.mxu0 %v236
  %547 = vmatprep.subr.mxu0 0.0
  %548 = vmatpush1.msra.mxu0 %v237
  %549 = vmatprep.subr.mxu0 0.0
  %550 = vmatpush1.msra.mxu0 %v238
  %551 = vmatprep.subr.mxu0 0.0
  %552 = vmatpush1.msra.mxu0 %v239
  %553 = vmatprep.subr.mxu0 0.0
  %554 = vmatpush1.msra.mxu0 %v240
  %555 = vmatprep.subr.mxu0 0.0
  %556 = vmatpush1.msra.mxu0 %v241
  %557 = vmatprep.subr.mxu0 0.0
  %558 = vmatpush1.msra.mxu0 %v242
  %559 = vmatprep.subr.mxu0 0.0
  %560 = vmatpush1.msra.mxu0 %v243
  %561 = vmatprep.subr.mxu0 0.0
  %562 = vmatpush1.msra.mxu0 %v244
  %563 = vmatprep.subr.mxu0 0.0
  %564 = vmatpush1.msra.mxu0 %v245
  %565 = vmatprep.subr.mxu0 0.0
  %566 = vmatpush1.msra.mxu0 %v246
  %567 = vmatprep.subr.mxu0 0.0
  %568 = vmatpush1.msra.mxu0 %v247
  %569 = vmatprep.subr.mxu0 0.0
  %570 = vmatpush1.msra.mxu0 %v248
  %571 = vmatprep.subr.mxu0 0.0
  %572 = vmatpush1.msra.mxu0 %v249
  %573 = vmatprep.subr.mxu0 0.0
  %574 = vmatpush1.msra.mxu0 %v250
  %575 = vmatprep.subr.mxu0 0.0
  %576 = vmatpush1.msra.mxu0 %v251
  %577 = vmatprep.mubr.f32.mxu0 %v294
  %578 = vmatmul.mubr.f32.gmra.mrb[0].mxu0 %v292
  %v579 = vpop.f32.mrb[0].mxu0
  %v580 = vadd.f32 %v510, %v579
  %v581 = vpop.f32.mrb[0].mxu0
  %582 = vdwg.mxu0
  %v583 = vmax.f32 %v580, 0.0
  %v584 = vld [vmem:[%s6] sm:$0xff]
  %v585 = vld [vmem:[%s6 + $0x8] sm:$0xff]
  %v586 = vld [vmem:[%s6 + $0x10] sm:$0xff]
  %v587 = vld [vmem:[%s6 + $0x18] sm:$0xff]
  %vm588 = vcmask 261120
  %v590 = vsel %vm588, %v121, 0
  %592 = vmatprep.subr.mxu0 0.0
  %593 = vmatpush1.msra.mxu0 %v584
  %594 = vmatprep.subr.mxu0 0.0
  %595 = vmatpush1.msra.mxu0 %v585
  %596 = vmatprep.subr.mxu0 0.0
  %597 = vmatpush1.msra.mxu0 %v586
  %598 = vmatprep.subr.mxu0 0.0
  %599 = vmatpush1.msra.mxu0 %v587
  %600 = vmatprep.subr.mxu0 0.0
  %601 = vmatpush1.msra.mxu0 0.0
  %602 = vmatprep.subr.mxu0 0.0
  %603 = vmatpush1.msra.mxu0 0.0
  %604 = vmatprep.subr.mxu0 0.0
  %605 = vmatpush1.msra.mxu0 0.0
  %606 = vmatprep.subr.mxu0 0.0
  %607 = vmatpush1.msra.mxu0 0.0
  %608 = vmatprep.subr.mxu0 0.0
  %609 = vmatpush1.msra.mxu0 0.0
  %610 = vmatprep.subr.mxu0 0.0
  %611 = vmatpush1.msra.mxu0 0.0
  %612 = vmatprep.subr.mxu0 0.0
  %613 = vmatpush1.msra.mxu0 0.0
  %614 = vmatprep.subr.mxu0 0.0
  %615 = vmatpush1.msra.mxu0 0.0
  %616 = vmatprep.subr.mxu0 0.0
  %617 = vmatpush1.msra.mxu0 0.0
  %618 = vmatprep.subr.mxu0 0.0
  %619 = vmatpush1.msra.mxu0 0.0
  %620 = vmatprep.subr.mxu0 0.0
  %621 = vmatpush1.msra.mxu0 0.0
  %622 = vmatprep.subr.mxu0 0.0
  %623 = vmatpush1.msra.mxu0 0.0
  %624 = vmatprep.subr.mxu0 0.0
  %625 = vmatpush1.msra.mxu0 0.0
  %626 = vmatprep.subr.mxu0 0.0
  %627 = vmatpush1.msra.mxu0 0.0
  %628 = vmatprep.subr.mxu0 0.0
  %629 = vmatpush1.msra.mxu0 0.0
  %630 = vmatprep.subr.mxu0 0.0
  %631 = vmatpush1.msra.mxu0 0.0
  %632 = vmatprep.subr.mxu0 0.0
  %633 = vmatpush1.msra.mxu0 0.0
  %634 = vmatprep.subr.mxu0 0.0
  %635 = vmatpush1.msra.mxu0 0.0
  %636 = vmatprep.subr.mxu0 0.0
  %637 = vmatpush1.msra.mxu0 0.0
  %638 = vmatprep.subr.mxu0 0.0
  %639 = vmatpush1.msra.mxu0 0.0
  %640 = vmatprep.subr.mxu0 0.0
  %641 = vmatpush1.msra.mxu0 0.0
  %642 = vmatprep.subr.mxu0 0.0
  %643 = vmatpush1.msra.mxu0 0.0
  %644 = vmatprep.subr.mxu0 0.0
  %645 = vmatpush1.msra.mxu0 0.0
  %646 = vmatprep.subr.mxu0 0.0
  %647 = vmatpush1.msra.mxu0 0.0
  %648 = vmatprep.subr.mxu0 0.0
  %649 = vmatpush1.msra.mxu0 0.0
  %650 = vmatprep.subr.mxu0 0.0
  %651 = vmatpush1.msra.mxu0 0.0
  %652 = vmatprep.subr.mxu0 0.0
  %653 = vmatpush1.msra.mxu0 0.0
  %654 = vmatprep.subr.mxu0 0.0
  %655 = vmatpush1.msra.mxu0 0.0
  %656 = vmatprep.mubr.f32.mxu0 0.0
  %657 = vmatmul.mubr.f32.gmra.mrb[0].mxu0 %v590
  %v658 = vpop.f32.mrb[0].mxu0
  %v659 = vadd.f32 0.0, %v658
  %v660 = vpop.f32.mrb[0].mxu0
  %661 = vdwg.mxu0
  %v662 = vld [vmem:[%s7] sm:$0xff]
  %v663 = vld [vmem:[%s7 + $0x8] sm:$0xff]
  %v664 = vld [vmem:[%s7 + $0x10] sm:$0xff]
  %v665 = vld [vmem:[%s7 + $0x18] sm:$0xff]
  %v667 = vsel %vm588, %v583, 0
  %669 = vmatprep.subr.mxu0 0.0
  %670 = vmatpush1.msra.mxu0 %v662
  %671 = vmatprep.subr.mxu0 0.0
  %672 = vmatpush1.msra.mxu0 %v663
  %673 = vmatprep.subr.mxu0 0.0
  %674 = vmatpush1.msra.mxu0 %v664
  %675 = vmatprep.subr.mxu0 0.0
  %676 = vmatpush1.msra.mxu0 %v665
  %677 = vmatprep.subr.mxu0 0.0
  %678 = vmatpush1.msra.mxu0 0.0
  %679 = vmatprep.subr.mxu0 0.0
  %680 = vmatpush1.msra.mxu0 0.0
  %681 = vmatprep.subr.mxu0 0.0
  %682 = vmatpush1.msra.mxu0 0.0
  %683 = vmatprep.subr.mxu0 0.0
  %684 = vmatpush1.msra.mxu0 0.0
  %685 = vmatprep.subr.mxu0 0.0
  %686 = vmatpush1.msra.mxu0 0.0
  %687 = vmatprep.subr.mxu0 0.0
  %688 = vmatpush1.msra.mxu0 0.0
  %689 = vmatprep.subr.mxu0 0.0
  %690 = vmatpush1.msra.mxu0 0.0
  %691 = vmatprep.subr.mxu0 0.0
  %692 = vmatpush1.msra.mxu0 0.0
  %693 = vmatprep.subr.mxu0 0.0
  %694 = vmatpush1.msra.mxu0 0.0
  %695 = vmatprep.subr.mxu0 0.0
  %696 = vmatpush1.msra.mxu0 0.0
  %697 = vmatprep.subr.mxu0 0.0
  %698 = vmatpush1.msra.mxu0 0.0
  %699 = vmatprep.subr.mxu0 0.0
  %700 = vmatpush1.msra.mxu0 0.0
  %701 = vmatprep.subr.mxu0 0.0
  %702 = vmatpush1.msra.mxu0 0.0
  %703 = vmatprep.subr.mxu0 0.0
  %704 = vmatpush1.msra.mxu0 0.0
  %705 = vmatprep.subr.mxu0 0.0
  %706 = vmatpush1.msra.mxu0 0.0
  %707 = vmatprep.subr.mxu0 0.0
  %708 = vmatpush1.msra.mxu0 0.0
  %709 = vmatprep.subr.mxu0 0.0
  %710 = vmatpush1.msra.mxu0 0.0
  %711 = vmatprep.subr.mxu0 0.0
  %712 = vmatpush1.msra.mxu0 0.0
  %713 = vmatprep.subr.mxu0 0.0
  %714 = vmatpush1.msra.mxu0 0.0
  %715 = vmatprep.subr.mxu0 0.0
  %716 = vmatpush1.msra.mxu0 0.0
  %717 = vmatprep.subr.mxu0 0.0
  %718 = vmatpush1.msra.mxu0 0.0
  %719 = vmatprep.subr.mxu0 0.0
  %720 = vmatpush1.msra.mxu0 0.0
  %721 = vmatprep.subr.mxu0 0.0
  %722 = vmatpush1.msra.mxu0 0.0
  %723 = vmatprep.subr.mxu0 0.0
  %724 = vmatpush1.msra.mxu0 0.0
  %725 = vmatprep.subr.mxu0 0.0
  %726 = vmatpush1.msra.mxu0 0.0
  %727 = vmatprep.subr.mxu0 0.0
  %728 = vmatpush1.msra.mxu0 0.0
  %729 = vmatprep.subr.mxu0 0.0
  %730 = vmatpush1.msra.mxu0 0.0
  %731 = vmatprep.subr.mxu0 0.0
  %732 = vmatpush1.msra.mxu0 0.0
  %733 = vmatprep.mubr.f32.mxu0 0.0
  %734 = vmatmul.mubr.f32.gmra.mrb[0].mxu0 %v667
  %v735 = vpop.f32.mrb[0].mxu0
  %v736 = vadd.f32 0.0, %v735
  %v737 = vpop.f32.mrb[0].mxu0
  %738 = vdwg.mxu0
  %s739 = sld [smem:[#allocation2]]
  %v740 = vmul.f32 %v659, %v659
  %vm741 = vcmask 123904
  %v742 = vsel %vm741, %v740, 0.0
  %743 = vadd.xlane.f32.xlu0 %v742
  %v744 = vpop.xlane.xlu0 %743
  %v745 = vmax.f32 %v744, 1e-24
  %v746 = vrsqrt.pop %v745
  %v747 = vstv %s739
  %v748 = vmul.f32 %v747, %v746
  %v749 = vmul.f32 %v736, %v736
  %v750 = vsel %vm741, %v749, 0.0
  %751 = vadd.xlane.f32.xlu0 %v750
  %v752 = vpop.xlane.xlu0 %751
  %v753 = vmax.f32 %v752, 1e-24
  %v754 = vrsqrt.pop %v753
  %v755 = vmul.f32 %v659, %v748
  %v756 = vmul.f32 %v736, %v754
  %vm757 = vcmask 130048
  %v759 = vsel %vm757, %v755, 0
  %v762 = vsel %vm757, %v756, 0
  %764 = vmatprep.subr.mxu0 0.0
  %765 = vmatpush1.xpose.msra.mxu0 %v762
  %766 = vmatprep.subr.mxu0 0.0
  %767 = vmatpush1.xpose.msra.mxu0 0.0
  %768 = vmatprep.subr.mxu0 0.0
  %769 = vmatpush1.xpose.msra.mxu0 0.0
  %770 = vmatprep.subr.mxu0 0.0
  %771 = vmatpush1.xpose.msra.mxu0 0.0
  %772 = vmatprep.subr.mxu0 0.0
  %773 = vmatpush1.xpose.msra.mxu0 0.0
  %774 = vmatprep.subr.mxu0 0.0
  %775 = vmatpush1.xpose.msra.mxu0 0.0
  %776 = vmatprep.subr.mxu0 0.0
  %777 = vmatpush1.xpose.msra.mxu0 0.0
  %778 = vmatprep.subr.mxu0 0.0
  %779 = vmatpush1.xpose.msra.mxu0 0.0
  %780 = vmatprep.subr.mxu0 0.0
  %781 = vmatpush1.xpose.msra.mxu0 0.0
  %782 = vmatprep.subr.mxu0 0.0
  %783 = vmatpush1.xpose.msra.mxu0 0.0
  %784 = vmatprep.subr.mxu0 0.0
  %785 = vmatpush1.xpose.msra.mxu0 0.0
  %786 = vmatprep.subr.mxu0 0.0
  %787 = vmatpush1.xpose.msra.mxu0 0.0
  %788 = vmatprep.subr.mxu0 0.0
  %789 = vmatpush1.xpose.msra.mxu0 0.0
  %790 = vmatprep.subr.mxu0 0.0
  %791 = vmatpush1.xpose.msra.mxu0 0.0
  %792 = vmatprep.subr.mxu0 0.0
  %793 = vmatpush1.xpose.msra.mxu0 0.0
  %794 = vmatprep.subr.mxu0 0.0
  %795 = vmatpush1.xpose.msra.mxu0 0.0
  %796 = vmatprep.subr.mxu0 0.0
  %797 = vmatpush1.xpose.msra.mxu0 0.0
  %798 = vmatprep.subr.mxu0 0.0
  %799 = vmatpush1.xpose.msra.mxu0 0.0
  %800 = vmatprep.subr.mxu0 0.0
  %801 = vmatpush1.xpose.msra.mxu0 0.0
  %802 = vmatprep.subr.mxu0 0.0
  %803 = vmatpush1.xpose.msra.mxu0 0.0
  %804 = vmatprep.subr.mxu0 0.0
  %805 = vmatpush1.xpose.msra.mxu0 0.0
  %806 = vmatprep.subr.mxu0 0.0
  %807 = vmatpush1.xpose.msra.mxu0 0.0
  %808 = vmatprep.subr.mxu0 0.0
  %809 = vmatpush1.xpose.msra.mxu0 0.0
  %810 = vmatprep.subr.mxu0 0.0
  %811 = vmatpush1.xpose.msra.mxu0 0.0
  %812 = vmatprep.subr.mxu0 0.0
  %813 = vmatpush1.xpose.msra.mxu0 0.0
  %814 = vmatprep.subr.mxu0 0.0
  %815 = vmatpush1.xpose.msra.mxu0 0.0
  %816 = vmatprep.subr.mxu0 0.0
  %817 = vmatpush1.xpose.msra.mxu0 0.0
  %818 = vmatprep.subr.mxu0 0.0
  %819 = vmatpush1.xpose.msra.mxu0 0.0
  %820 = vmatprep.subr.mxu0 0.0
  %821 = vmatpush1.xpose.msra.mxu0 0.0
  %822 = vmatprep.subr.mxu0 0.0
  %823 = vmatpush1.xpose.msra.mxu0 0.0
  %824 = vmatprep.subr.mxu0 0.0
  %825 = vmatpush1.xpose.msra.mxu0 0.0
  %826 = vmatprep.subr.mxu0 0.0
  %827 = vmatpush1.xpose.msra.mxu0 0.0
  %828 = vmatprep.mubr.f32.mxu0 0.0
  %829 = vmatmul.mubr.f32.gmra.mrb[0].mxu0 %v759
  %v830 = vpop.f32.mrb[0].mxu0
  %v831 = vadd.f32 0.0, %v830
  %v832 = vpop.f32.mrb[0].mxu0
  %833 = vdwg.mxu0
  %vm834 = vcmask 9216
  %835 = vst.msk [vmem:[%s9] sm:$0x3] %vm834, %v831
  // Predicated region
  $region38: #{clip_forward.1} parent=0 // pred_check
    _
  $region39: #{clip_forward.1} parent=0 // pred_check_branch
    %837 = sbr.rel (0) target = $region41
  $region40: #{clip_forward.1} parent=0 // pred_region
    _
  $region41: #{clip_forward.1} parent=0 // pred_fallthru
    _
  // Predicated region
  $region42: #{clip_forward.1} parent=0 // pred_check
    _
  $region43: #{clip_forward.1} parent=0 // pred_check_branch
    %839 = sbr.rel (0) target = $region45
  $region44: #{clip_forward.1} parent=0 // pred_region
    _
  $region45: #{clip_forward.1} parent=0 // pred_fallthru
    _

</llo_original>
